<compile_context>
chip_gen: v5e
topology: v5e:2x2
jax: 0.10.0
libtpu: 0.0.40
codegen_flags: <defaults>
</compile_context>

<pallas_src>
import math

import jax
import jax.numpy as jnp
import numpy as np
from jax.experimental import pallas as pl
from jax.experimental.pallas import tpu as pltpu

_LANE = 128
_VMEM_BUDGET = 12 << 20            # double-buffered working-set target (bytes)
_MVN_PALLAS_MIN_BATCH = 2 * _LANE  # below this, plain JAX beats kernel launch


def _round_up(n, m):
    return ((n + m - 1) // m) * m


def _balanced_tile(extent, cap, mult):
    """Tile <= cap that is a multiple of `mult` (or == extent), balanced so the
    grid has >= 2 roughly equal steps whenever the extent allows (keeps both
    v7x TensorCores busy and avoids the round-up-to-cap work blowup)."""
    if extent <= mult:
        return extent                          # single block == full dim (allowed)
    steps = max(2, pl.cdiv(extent, cap))
    return min(cap, _round_up(pl.cdiv(extent, steps), mult))


def _elementwise_plan(S, n, itemsize, n_in, n_out):
    """Tiling plan for a flattened [S, n] elementwise fusion.

    Never materializes padding: if n is a multiple of 128 the flat axis is
    reshaped (free) to (rows, 128); otherwise the flat axis itself is the
    (ragged) lane axis.  Returns (R, C, rt, ct, grid)."""
    if n >= _LANE and n % _LANE == 0:
        R, C = n // _LANE, _LANE
    else:
        R, C = 1, n
    # Bytes per element of the double-buffered working set (inputs + outputs).
    per_elem = 2 * (n_in * S + n_out) * itemsize
    if C == _LANE:                             # tile the row (sublane) axis
        sub = 16 if itemsize == 2 else 8
        cap = max(sub, min(1024, (_VMEM_BUDGET // (per_elem * _LANE)) // sub * sub))
        rt, ct = _balanced_tile(R, cap, sub), _LANE
    else:                                      # tile the flat lane axis directly
        cap = max(_LANE, min(1 << 16, (_VMEM_BUDGET // per_elem) // _LANE * _LANE))
        rt, ct = 1, _balanced_tile(C, cap, _LANE)
    return R, C, rt, ct, (pl.cdiv(R, rt), pl.cdiv(C, ct))


# ----------------------------------------------------------------------------
# Kernels
# ----------------------------------------------------------------------------
def _normal_fusion_kernel(loc_ref, scale_ref, out_loc_ref, out_scale_ref):
    loc = loc_ref[...].astype(jnp.float32)         # (S, rt, ct), in-VMEM upcast
    scale = scale_ref[...].astype(jnp.float32)
    inv_var = pl.reciprocal(scale * scale)         # per-sensor precision (exact)
    prec_sum = jnp.sum(inv_var, axis=0)            # (rt, ct)
    eta = jnp.sum(loc * inv_var, axis=0)           # (rt, ct)
    # loc = eta / prec_sum, scale = rsqrt(prec_sum)   (the -0.5 factors cancel)
    out_loc_ref[...] = (eta * pl.reciprocal(prec_sum)).astype(out_loc_ref.dtype)
    out_scale_ref[...] = jax.lax.rsqrt(prec_sum).astype(out_scale_ref.dtype)


def _logits_fusion_kernel(logits_ref, out_ref):
    x = logits_ref[...].astype(jnp.float32)        # (S, rt, ct)
    out_ref[...] = jnp.sum(x, axis=0).astype(out_ref.dtype)


def _mvn_natural_sum_kernel(loc_ref, prec_ref, eta_ref, prec_sum_ref):
    # loc_ref: (S, D, bt) [s, d, b-lane]; prec_ref: (S, D, D, bt) [s, j, d, b]
    # eta_ref: (D, bt);  prec_sum_ref: (D, D, bt) [j, d, b]  (batch on lanes)
    S, D = loc_ref.shape[0], loc_ref.shape[1]
    eta = jnp.zeros(eta_ref.shape, jnp.float32)
    for s in range(S):               # S is small & static -> unrolled accumulation
        ls = loc_ref[s].astype(jnp.float32)        # (D, bt)
        ps = prec_ref[s].astype(jnp.float32)       # (D, D, bt)
        # Precision sum accumulates straight into the output block (bounds vregs).
        if s == 0:
            prec_sum_ref[...] = ps
        else:
            prec_sum_ref[...] = prec_sum_ref[...] + ps
        # eta[d, b] += sum_j P_s[d, j, b] * mu_s[j, b]; j never touches lanes.
        for j in range(D):
            eta = eta + ps[j] * ls[j:j + 1, :]
    eta_ref[...] = eta


# ----------------------------------------------------------------------------
# Wrappers
# ----------------------------------------------------------------------------
def fuse_normal(locs, scales):
    """locs, scales: [S, *batch] -> (loc [*batch], scale [*batch]); dtype kept."""
    S, batch_shape, dtype = locs.shape[0], locs.shape[1:], locs.dtype
    n = math.prod(batch_shape)
    R, C, rt, ct, grid = _elementwise_plan(S, n, dtype.itemsize, n_in=2, n_out=2)
    in_spec = pl.BlockSpec((S, rt, ct), lambda i, j: (0, i, j))
    out_spec = pl.BlockSpec((rt, ct), lambda i, j: (i, j))
    out_loc, out_scale = pl.pallas_call(
        _normal_fusion_kernel,
        grid=grid,
        in_specs=[in_spec, in_spec],
        out_specs=(out_spec, out_spec),
        out_shape=(jax.ShapeDtypeStruct((R, C), dtype),
                   jax.ShapeDtypeStruct((R, C), dtype)),
        compiler_params=pltpu.CompilerParams(
            dimension_semantics=("parallel", "parallel")),
    )(locs.reshape(S, R, C), scales.reshape(S, R, C))
    return out_loc.reshape(batch_shape), out_scale.reshape(batch_shape)


def fuse_logits(logits):
    """logits: [S, *batch] -> fused logits [*batch] (Bernoulli / Categorical)."""
    S, batch_shape, dtype = logits.shape[0], logits.shape[1:], logits.dtype
    n = math.prod(batch_shape)
    R, C, rt, ct, grid = _elementwise_plan(S, n, dtype.itemsize, n_in=1, n_out=1)
    out = pl.pallas_call(
        _logits_fusion_kernel,
        grid=grid,
        in_specs=[pl.BlockSpec((S, rt, ct), lambda i, j: (0, i, j))],
        out_specs=pl.BlockSpec((rt, ct), lambda i, j: (i, j)),
        out_shape=jax.ShapeDtypeStruct((R, C), dtype),
        compiler_params=pltpu.CompilerParams(
            dimension_semantics=("parallel", "parallel")),
    )(logits.reshape(S, R, C))
    return out.reshape(batch_shape)


def fuse_mvn(locs, precisions):
    """locs: [S, B, D], precisions: [S, B, D, D] -> (loc [B, D], cov [B, D, D])."""
    S, B, D = locs.shape
    in_dtype = locs.dtype
    if B < _MVN_PALLAS_MIN_BATCH:
        # Small problem: kernel launch + layout plumbing dominates; plain JAX.
        prec32 = precisions.astype(jnp.float32)
        eta = jnp.einsum("sbij,sbj->bi", prec32, locs.astype(jnp.float32))
        prec_sum = jnp.sum(prec32, axis=0)
    else:
        # Lane-dense layout: batch on the lane axis (transposes are cheap plumbing).
        loc_t = jnp.transpose(locs, (0, 2, 1))               # [s, d, b]
        prec_t = jnp.transpose(precisions, (0, 3, 2, 1))     # [s, j, d, b]
        itemsize = in_dtype.itemsize
        per_lane = 2 * (S * (D + D * D) * itemsize + (D + D * D) * 4)
        cap = max(_LANE, min(512, (_VMEM_BUDGET // per_lane) // _LANE * _LANE))
        bt = _balanced_tile(B, cap, _LANE)
        eta_t, prec_sum_t = pl.pallas_call(
            _mvn_natural_sum_kernel,
            grid=(pl.cdiv(B, bt),),
            in_specs=[pl.BlockSpec((S, D, bt), lambda i: (0, 0, i)),
                      pl.BlockSpec((S, D, D, bt), lambda i: (0, 0, 0, i))],
            out_specs=(pl.BlockSpec((D, bt), lambda i: (0, i)),
                       pl.BlockSpec((D, D, bt), lambda i: (0, 0, i))),
            out_shape=(jax.ShapeDtypeStruct((D, B), jnp.float32),
                       jax.ShapeDtypeStruct((D, D, B), jnp.float32)),
            compiler_params=pltpu.CompilerParams(
                dimension_semantics=("parallel",)),
        )(loc_t, prec_t)
        eta = eta_t.T                                         # (B, D)
        prec_sum = jnp.transpose(prec_sum_t, (2, 1, 0))       # (B, D, D)
    # TODO(synk): the batched SPD (Cholesky) inverse has no clean Pallas TPU
    # equivalent; the natural-parameter reduction is in-kernel, inverse in JAX.
    chol = jnp.linalg.cholesky(prec_sum)                      # (B, D, D)
    eye = jnp.broadcast_to(jnp.eye(D, dtype=jnp.float32), (B, D, D))
    linv = jax.lax.linalg.triangular_solve(chol, eye, left_side=True, lower=True)
    cov = jnp.einsum("bki,bkj->bij", linv, linv)              # (L L^T)^{-1}
    loc = jnp.einsum("bij,bj->bi", cov, eta)
    return loc.astype(in_dtype), cov.astype(in_dtype)


# ----------------------------------------------------------------------------
# Pure-JAX references for sanity checking
# ----------------------------------------------------------------------------
def _ref_normal(locs, scales):
    locs = locs.astype(jnp.float32)
    scales = scales.astype(jnp.float32)
    var = scales ** 2
    eta = jnp.sum(locs / var, axis=0)
    neg_prec = jnp.sum(-0.5 / var, axis=0)
    return -0.5 * eta / neg_prec, jnp.sqrt(-0.5 / neg_prec)


def _ref_logits(logits):
    return jnp.sum(logits.astype(jnp.float32), axis=0)


def _ref_mvn(locs, precisions):
    locs = locs.astype(jnp.float32)
    precisions = precisions.astype(jnp.float32)
    eta = jnp.einsum("sbij,sbj->bi", precisions, locs)
    prec_sum = jnp.sum(precisions, axis=0)
    cov = jnp.linalg.inv(prec_sum)
    return jnp.einsum("bij,bj->bi", cov, eta), cov


# ----------------------------------------------------------------------------
if __name__ == "__main__":
    key = jax.random.PRNGKey(0)
    ks = jax.random.split(key, 12)
    S = 3

    # --- Normal fusion, small, flat size a multiple of 128 (rows-of-128 layout) ---
    locs = jax.random.normal(ks[0], (S, 8, 32), dtype=jnp.float32)
    scales = 0.5 + jax.nn.softplus(jax.random.normal(ks[1], (S, 8, 32))).astype(jnp.float32)
    loc_f, scale_f = fuse_normal(locs, scales)
    jax.block_until_ready((loc_f, scale_f))
    loc_r, scale_r = _ref_normal(locs, scales)
    np.testing.assert_allclose(np.asarray(loc_f), np.asarray(loc_r), rtol=3e-4, atol=1e-5)
    np.testing.assert_allclose(np.asarray(scale_f), np.asarray(scale_r), rtol=3e-4, atol=1e-5)

    # --- Normal fusion, awkward flat size (ragged lane-axis grid, no padding) ---
    locs_b = jax.random.normal(ks[2], (2, 70, 257), dtype=jnp.float32)
    scales_b = 0.5 + jax.nn.softplus(jax.random.normal(ks[3], (2, 70, 257))).astype(jnp.float32)
    loc_fb, scale_fb = fuse_normal(locs_b, scales_b)
    jax.block_until_ready((loc_fb, scale_fb))
    loc_rb, scale_rb = _ref_normal(locs_b, scales_b)
    np.testing.assert_allclose(np.asarray(loc_fb), np.asarray(loc_rb), rtol=3e-4, atol=1e-5)
    np.testing.assert_allclose(np.asarray(scale_fb), np.asarray(scale_rb), rtol=3e-4, atol=1e-5)

    # --- Categorical / Bernoulli logits fusion (f32) ---
    logits = jax.random.normal(ks[4], (S, 8, 16), dtype=jnp.float32)
    logits_f = fuse_logits(logits)
    jax.block_until_ready(logits_f)
    np.testing.assert_allclose(np.asarray(logits_f), np.asarray(_ref_logits(logits)),
                               rtol=1e-5, atol=1e-6)

    # --- Logits fusion, bf16 input (dtype-preserving, in-kernel upcast) ---
    logits16 = jax.random.normal(ks[5], (2, 64, 128), dtype=jnp.float32).astype(jnp.bfloat16)
    logits16_f = fuse_logits(logits16)
    jax.block_until_ready(logits16_f)
    assert logits16_f.dtype == jnp.bfloat16
    np.testing.assert_allclose(np.asarray(logits16_f.astype(jnp.float32)),
                               np.asarray(_ref_logits(logits16)), rtol=2e-2, atol=2e-2)

    # --- MultivariateNormal fusion, tiny batch (plain-JAX fallback path) ---
    Dm = 8
    mvn_locs = jax.random.normal(ks[6], (S, 8, Dm), dtype=jnp.float32)
    A = jax.random.normal(ks[7], (S, 8, Dm, Dm), dtype=jnp.float32)
    precisions = jnp.einsum("sbij,sbkj->sbik", A, A) + 2.0 * jnp.eye(Dm, dtype=jnp.float32)
    mvn_loc_f, mvn_cov_f = fuse_mvn(mvn_locs, precisions)
    jax.block_until_ready((mvn_loc_f, mvn_cov_f))
    mvn_loc_r, mvn_cov_r = _ref_mvn(mvn_locs, precisions)
    np.testing.assert_allclose(np.asarray(mvn_loc_f), np.asarray(mvn_loc_r), rtol=2e-3, atol=5e-4)
    np.testing.assert_allclose(np.asarray(mvn_cov_f), np.asarray(mvn_cov_r), rtol=2e-3, atol=5e-4)

    # --- MultivariateNormal fusion, larger batch (lane-dense Pallas kernel) ---
    Bl = 384   # 2-step lane grid with a ragged final block
    mvn_locs_l = jax.random.normal(ks[8], (S, Bl, Dm), dtype=jnp.float32)
    Al = jax.random.normal(ks[9], (S, Bl, Dm, Dm), dtype=jnp.float32)
    precisions_l = jnp.einsum("sbij,sbkj->sbik", Al, Al) + 2.0 * jnp.eye(Dm, dtype=jnp.float32)
    mvn_loc_l, mvn_cov_l = fuse_mvn(mvn_locs_l, precisions_l)
    jax.block_until_ready((mvn_loc_l, mvn_cov_l))
    mvn_loc_lr, mvn_cov_lr = _ref_mvn(mvn_locs_l, precisions_l)
    np.testing.assert_allclose(np.asarray(mvn_loc_l), np.asarray(mvn_loc_lr), rtol=2e-3, atol=5e-4)
    np.testing.assert_allclose(np.asarray(mvn_cov_l), np.asarray(mvn_cov_lr), rtol=2e-3, atol=5e-4)

    print("KERNEL_OK")
</pallas_src>

<mosaic_0001>
module attributes {stable_mosaic.version = 11 : i64} {
  func.func @_normal_fusion_kernel(%arg0: i32, %arg1: i32, %arg2: memref<3x2x128xf32, #tpu.memory_space<vmem>>, %arg3: memref<3x2x128xf32, #tpu.memory_space<vmem>>, %arg4: memref<2x128xf32, #tpu.memory_space<vmem>>, %arg5: memref<2x128xf32, #tpu.memory_space<vmem>>) attributes {dimension_semantics = [#tpu.dimension_semantics<parallel>, #tpu.dimension_semantics<parallel>], iteration_bounds = array<i64: 1, 1>, scalar_prefetch = 0 : i64, scratch_operands = 0 : i64, tpu.core_type = #tpu.core_type<tc>, window_params = [{transform_indices = @transform_0, window_bounds = array<i64: 3, 2, 128>}, {transform_indices = @transform_1, window_bounds = array<i64: 3, 2, 128>}, {transform_indices = @transform_2, window_bounds = array<i64: 2, 128>}, {transform_indices = @transform_3, window_bounds = array<i64: 2, 128>}]} {
    %c0 = arith.constant 0 : index
    %c0_0 = arith.constant 0 : index
    %c0_1 = arith.constant 0 : index
    %0 = vector.load %arg2[%c0, %c0_0, %c0_1] : memref<3x2x128xf32, #tpu.memory_space<vmem>>, vector<3x2x128xf32>
    %c0_2 = arith.constant 0 : index
    %c0_3 = arith.constant 0 : index
    %c0_4 = arith.constant 0 : index
    %1 = vector.load %arg3[%c0_2, %c0_3, %c0_4] : memref<3x2x128xf32, #tpu.memory_space<vmem>>, vector<3x2x128xf32>
    %2 = arith.mulf %1, %1 : vector<3x2x128xf32>
    %3 = tpu.reciprocal %2 : vector<3x2x128xf32> -> vector<3x2x128xf32>
    %cst = arith.constant dense<0.000000e+00> : vector<2x128xf32>
    %4 = vector.multi_reduction <add>, %3, %cst [0] : vector<3x2x128xf32> to vector<2x128xf32>
    %5 = arith.mulf %0, %3 : vector<3x2x128xf32>
    %cst_5 = arith.constant dense<0.000000e+00> : vector<2x128xf32>
    %6 = vector.multi_reduction <add>, %5, %cst_5 [0] : vector<3x2x128xf32> to vector<2x128xf32>
    %7 = tpu.reciprocal %4 : vector<2x128xf32> -> vector<2x128xf32>
    %8 = arith.mulf %6, %7 : vector<2x128xf32>
    %c0_6 = arith.constant 0 : index
    %c0_7 = arith.constant 0 : index
    %9 = vector.load %arg4[%c0_6, %c0_7] : memref<2x128xf32, #tpu.memory_space<vmem>>, vector<2x128xf32>
    tpu.vector_store %arg4[%c0_6, %c0_7], %8 {strides = array<i32>} : memref<2x128xf32, #tpu.memory_space<vmem>>, vector<2x128xf32>,
    %10 = math.rsqrt %4 : vector<2x128xf32>
    %c0_8 = arith.constant 0 : index
    %c0_9 = arith.constant 0 : index
    %11 = vector.load %arg5[%c0_8, %c0_9] : memref<2x128xf32, #tpu.memory_space<vmem>>, vector<2x128xf32>
    tpu.vector_store %arg5[%c0_8, %c0_9], %10 {strides = array<i32>} : memref<2x128xf32, #tpu.memory_space<vmem>>, vector<2x128xf32>,
    return
  }
  func.func @transform_0(%arg0: i32, %arg1: i32) -> (i32, i32, i32) {
    %c0_i32 = arith.constant 0 : i32
    %c0_i32_0 = arith.constant 0 : i32
    return %c0_i32, %arg0, %arg1 : i32, i32, i32
  }
  func.func @transform_1(%arg0: i32, %arg1: i32) -> (i32, i32, i32) {
    %c0_i32 = arith.constant 0 : i32
    %c0_i32_0 = arith.constant 0 : i32
    return %c0_i32, %arg0, %arg1 : i32, i32, i32
  }
  func.func @transform_2(%arg0: i32, %arg1: i32) -> (i32, i32) {
    %c0_i32 = arith.constant 0 : i32
    return %arg0, %arg1 : i32, i32
  }
  func.func @transform_3(%arg0: i32, %arg1: i32) -> (i32, i32) {
    %c0_i32 = arith.constant 0 : i32
    return %arg0, %arg1 : i32, i32
  }
}

</mosaic_0001>

<llo_original>
// kernel: tpu_custom_call.1
$region0: #{tpu_custom_call.1}
  #allocation0 [shape = 'u32[]', space=smem, size = 0x4, offset = 0x4, fixed_abs, tag = 'smem constant byte address 0x4 - core index']
  #allocation1 [shape = 'u32[72,128]{1,0:T(1,128)}', space=vmem, size = 0x9000, scoped, tag = 'internal scratch']
  %s0 = inlined_call_operand.hbm [shape: f32[3,2,128], index: 0, kind: input, shape index: {}]
  %s1 = inlined_call_operand.hbm [shape: f32[3,2,128], index: 1, kind: input, shape index: {}]
  %s2 = inlined_call_operand.hbm [shape: f32[2,128], index: 2, kind: output, shape index: {0}]
  %s3 = inlined_call_operand.hbm [shape: f32[2,128], index: 3, kind: output, shape index: {1}]
  %4 = xla_tuple %s2, %s3
  %s5 = sld [smem:[#allocation0]]
  $region34: #{tpu_custom_call.1} parent=0
    _
  %s7 = ssub.s32 1, %s5
  %s8 = scalar_select 0, %s7, %s5
  $region1: #{tpu_custom_call.1} parent=0
    #allocation2 [shape = 'u8[3072]{0}', space=vmem, size = 0xc00, scoped, tag = 'input window, operand 0, single buffered']
    #allocation3 [shape = 's32[1]{0}', space=sflag, size = 0x4, scoped, tag = 'scoped memory for tpu_custom_call.1']
    #allocation4 [shape = 's32[1]{0}', space=sflag, size = 0x4, scoped, tag = 'scoped memory for tpu_custom_call.1']
    #allocation5 [shape = 'u8[3072]{0}', space=vmem, size = 0xc00, scoped, tag = 'input window, operand 1, single buffered']
    #allocation6 [shape = 's32[1]{0}', space=sflag, size = 0x4, scoped, tag = 'scoped memory for tpu_custom_call.1']
    #allocation7 [shape = 'u8[1024]{0}', space=vmem, size = 0x400, scoped, tag = 'output window, operand 0, single buffered']
    #allocation8 [shape = 'u8[1024]{0}', space=vmem, size = 0x400, scoped, tag = 'output window, operand 1, single buffered']
    #allocation9 [shape = 's32[1]{0}', space=sflag, size = 0x4, scoped, tag = 'scoped memory for tpu_custom_call.1']
    %9 = vsyncpa [#allocation3], 0
    %10 = vsyncpa [#allocation6], 0
    %11 = vsyncpa [#allocation4], 0
    %12 = vsyncpa [#allocation9], 0
    // Predicated region
    $region2: #{tpu_custom_call.1} parent=1 // pred_check
      _
    $region3: #{tpu_custom_call.1} parent=1 // pred_check_branch
      %14 = sbr.rel (0) target = $region5
    $region4: #{tpu_custom_call.1} parent=1 // pred_region
      %16 = vsyncadd [#allocation3], 0
      %s17 = sshll.u32 %s0, 4
      %s18 = int_to_ptr.hbm [resolvable:$true] %s17
      %s19 = sshll.u32 [#allocation2], 4
      %s20 = int_to_ptr.vmem [resolvable:$true] %s19
      %25 = dma.hbm_to_vmem [thread:$0]  %s18, 96, %s20, [#allocation3], 32, 32, 2
    $region5: #{tpu_custom_call.1} parent=1 // pred_fallthru
      _
    // Predicated region
    $region6: #{tpu_custom_call.1} parent=1 // pred_check
      _
    $region7: #{tpu_custom_call.1} parent=1 // pred_check_branch
      %27 = sbr.rel (0) target = $region9
    $region8: #{tpu_custom_call.1} parent=1 // pred_region
      %29 = vsyncadd [#allocation6], 0
      %s30 = sshll.u32 %s1, 4
      %s31 = int_to_ptr.hbm [resolvable:$true] %s30
      %s32 = sshll.u32 [#allocation5], 4
      %s33 = int_to_ptr.vmem [resolvable:$true] %s32
      %38 = dma.hbm_to_vmem [thread:$0]  %s31, 96, %s33, [#allocation6], 32, 32, 2
    $region9: #{tpu_custom_call.1} parent=1 // pred_fallthru
      _
    // Predicated region
    $region10: #{tpu_custom_call.1} parent=1 // pred_check
      _
    $region11: #{tpu_custom_call.1} parent=1 // pred_check_branch
      %40 = sbr.rel (0) target = $region13
    $region12: #{tpu_custom_call.1} parent=1 // pred_region
      %42 = dma.done [#allocation3], 96
    $region13: #{tpu_custom_call.1} parent=1 // pred_fallthru
      _
    // Predicated region
    $region14: #{tpu_custom_call.1} parent=1 // pred_check
      _
    $region15: #{tpu_custom_call.1} parent=1 // pred_check_branch
      %44 = sbr.rel (0) target = $region17
    $region16: #{tpu_custom_call.1} parent=1 // pred_region
      %46 = dma.done [#allocation6], 96
    $region17: #{tpu_custom_call.1} parent=1 // pred_fallthru
      _
    %v47 = vld [vmem:[#allocation2] sm:$0x3]
    %v48 = vld [vmem:[#allocation2 + $0x2] sm:$0x3]
    %v49 = vld [vmem:[#allocation2 + $0x4] sm:$0x3]
    %v50 = vld [vmem:[#allocation5] sm:$0x3]
    %v51 = vld [vmem:[#allocation5 + $0x2] sm:$0x3]
    %v52 = vld [vmem:[#allocation5 + $0x4] sm:$0x3]
    %v53 = vmul.f32 %v50, %v50
    %v54 = vmul.f32 %v51, %v51
    %v55 = vmul.f32 %v52, %v52
    %v56 = vrcp.pop %v53
    %v57 = vmul.f32 %v53, %v56
    %v58 = vsub.f32 1.0, %v57
    %v59 = vmul.f32 %v56, %v58
    %v60 = vadd.f32 %v56, %v59
    %vm61 = vweird.f32 %v53
    %vm62 = vweird.f32 %v56
    %vm63 = vmor %vm61, %vm62
    %v64 = vsel %vm63, %v56, %v60
    %v65 = vand.u32 2147483647, %v53
    %vm66 = vcmp.eq.f32.partialorder %v65, 8.507059e+37
    %v67 = vand.u32 %v53, 2147483648
    %v68 = vor.u32 1.1754944e-38, %v67
    %v69 = vsel %vm66, %v68, %v64
    %v70 = vrcp.pop %v54
    %v71 = vmul.f32 %v54, %v70
    %v72 = vsub.f32 1.0, %v71
    %v73 = vmul.f32 %v70, %v72
    %v74 = vadd.f32 %v70, %v73
    %vm75 = vweird.f32 %v54
    %vm76 = vweird.f32 %v70
    %vm77 = vmor %vm75, %vm76
    %v78 = vsel %vm77, %v70, %v74
    %v79 = vand.u32 2147483647, %v54
    %vm80 = vcmp.eq.f32.partialorder %v79, 8.507059e+37
    %v81 = vand.u32 %v54, 2147483648
    %v82 = vor.u32 1.1754944e-38, %v81
    %v83 = vsel %vm80, %v82, %v78
    %v84 = vrcp.pop %v55
    %v85 = vmul.f32 %v55, %v84
    %v86 = vsub.f32 1.0, %v85
    %v87 = vmul.f32 %v84, %v86
    %v88 = vadd.f32 %v84, %v87
    %vm89 = vweird.f32 %v55
    %vm90 = vweird.f32 %v84
    %vm91 = vmor %vm89, %vm90
    %v92 = vsel %vm91, %v84, %v88
    %v93 = vand.u32 2147483647, %v55
    %vm94 = vcmp.eq.f32.partialorder %v93, 8.507059e+37
    %v95 = vand.u32 %v55, 2147483648
    %v96 = vor.u32 1.1754944e-38, %v95
    %v97 = vsel %vm94, %v96, %v92
    %vm98 = vcmask 1041408
    %v99 = vsel %vm98, %v69, 0.0
    %v100 = vsel %vm98, %v83, 0.0
    %v101 = vadd.f32 %v99, %v100
    %v102 = vsel %vm98, %v97, 0.0
    %v103 = vadd.f32 %v101, %v102
    %v104 = vmul.f32 %v47, %v69
    %v105 = vmul.f32 %v48, %v83
    %v106 = vmul.f32 %v49, %v97
    %v107 = vsel %vm98, %v104, 0.0
    %v108 = vsel %vm98, %v105, 0.0
    %v109 = vadd.f32 %v107, %v108
    %v110 = vsel %vm98, %v106, 0.0
    %v111 = vadd.f32 %v109, %v110
    %v112 = vrcp.pop %v103
    %v113 = vmul.f32 %v103, %v112
    %v114 = vsub.f32 1.0, %v113
    %v115 = vmul.f32 %v112, %v114
    %v116 = vadd.f32 %v112, %v115
    %vm117 = vweird.f32 %v103
    %vm118 = vweird.f32 %v112
    %vm119 = vmor %vm117, %vm118
    %v120 = vsel %vm119, %v112, %v116
    %v121 = vand.u32 2147483647, %v103
    %vm122 = vcmp.eq.f32.partialorder %v121, 8.507059e+37
    %v123 = vand.u32 %v103, 2147483648
    %v124 = vor.u32 1.1754944e-38, %v123
    %v125 = vsel %vm122, %v124, %v120
    %v126 = vmul.f32 %v111, %v125
    %127 = vst [vmem:[#allocation7] sm:$0x3] %v126
    %v128 = vrsqrt.pop %v103
    %v129 = vmul.f32 %v128, %v103
    %v130 = vmul.f32 %v129, %v128
    %v131 = vmul.f32 0.5, %v130
    %v132 = vsub.f32 1.5, %v131
    %v133 = vmul.f32 %v128, %v132
    %vm134 = vweird.f32 %v103
    %vm135 = vweird.f32 %v128
    %vm136 = vmor %vm134, %vm135
    %v137 = vsel %vm136, %v128, %v133
    %138 = vst [vmem:[#allocation8] sm:$0x3] %v137
    // Predicated region
    $region18: #{tpu_custom_call.1} parent=1 // pred_check
      _
    $region19: #{tpu_custom_call.1} parent=1 // pred_check_branch
      %140 = sbr.rel (0) target = $region21
    $region20: #{tpu_custom_call.1} parent=1 // pred_region
      %142 = vsyncadd [#allocation4], 0
      %s144 = sshll.u32 [#allocation7], 4
      %s145 = int_to_ptr.vmem [resolvable:$true] %s144
      %s146 = sshll.u32 %s2, 4
      %s147 = int_to_ptr.hbm [resolvable:$true] %s146
      %149 = dma.vmem_to_hbm [thread:$0]  %s145, 32, %s147, [#allocation4]
    $region21: #{tpu_custom_call.1} parent=1 // pred_fallthru
      _
    // Predicated region
    $region22: #{tpu_custom_call.1} parent=1 // pred_check
      _
    $region23: #{tpu_custom_call.1} parent=1 // pred_check_branch
      %151 = sbr.rel (0) target = $region25
    $region24: #{tpu_custom_call.1} parent=1 // pred_region
      %153 = vsyncadd [#allocation9], 0
      %s155 = sshll.u32 [#allocation8], 4
      %s156 = int_to_ptr.vmem [resolvable:$true] %s155
      %s157 = sshll.u32 %s3, 4
      %s158 = int_to_ptr.hbm [resolvable:$true] %s157
      %160 = dma.vmem_to_hbm [thread:$0]  %s156, 32, %s158, [#allocation9]
    $region25: #{tpu_custom_call.1} parent=1 // pred_fallthru
      _
    // Predicated region
    $region26: #{tpu_custom_call.1} parent=1 // pred_check
      _
    $region27: #{tpu_custom_call.1} parent=1 // pred_check_branch
      %162 = sbr.rel (0) target = $region29
    $region28: #{tpu_custom_call.1} parent=1 // pred_region
      %164 = dma.done [#allocation4], 32
    $region29: #{tpu_custom_call.1} parent=1 // pred_fallthru
      _
    // Predicated region
    $region30: #{tpu_custom_call.1} parent=1 // pred_check
      _
    $region31: #{tpu_custom_call.1} parent=1 // pred_check_branch
      %166 = sbr.rel (0) target = $region33
    $region32: #{tpu_custom_call.1} parent=1 // pred_region
      %168 = dma.done [#allocation9], 32
    $region33: #{tpu_custom_call.1} parent=1 // pred_fallthru
      _
    %169 = vsyncpa [#allocation3], 1
    %170 = vsyncpa [#allocation6], 1
    %171 = vsyncpa [#allocation4], 1
    %172 = vsyncpa [#allocation9], 1

</llo_original>
